<compile_context>
chip_gen: v7x
topology: tpu7x:2x2x1
jax: 0.10.0
libtpu: 0.0.40
codegen_flags: <defaults>
</compile_context>

<pallas_src>
import functools

import jax
import jax.numpy as jnp
from jax.experimental import pallas as pl
from jax.experimental.pallas import tpu as pltpu


# --------------------------------------------------------------------------
# Kernels
# --------------------------------------------------------------------------
def _linear_kernel(x_ref, w_ref, b_ref, o_ref, *, mxu_dtype=None):
    """One (tm, tn) output block: full-K MXU matmul + fused bias, single pass."""
    x = x_ref[...]
    w = w_ref[...]
    if mxu_dtype is not None:           # bf16 operands, f32 accumulate
        x = x.astype(mxu_dtype)
        w = w.astype(mxu_dtype)
    o_ref[...] = (
        jnp.dot(x, w, preferred_element_type=jnp.float32) + b_ref[...]
    ).astype(o_ref.dtype)


def _linear_kernel_ktiled(x_ref, w_ref, b_ref, o_ref, acc_ref, *, mxu_dtype=None):
    """K-tiled variant: f32 accumulator resident across the trailing K axis."""
    k = pl.program_id(2)

    @pl.when(k == 0)
    def _():
        acc_ref[...] = jnp.zeros_like(acc_ref)

    x = x_ref[...]
    w = w_ref[...]
    if mxu_dtype is not None:
        x = x.astype(mxu_dtype)
        w = w.astype(mxu_dtype)
    acc_ref[...] += jnp.dot(x, w, preferred_element_type=jnp.float32)

    @pl.when(k == pl.num_programs(2) - 1)
    def _():
        o_ref[...] = (acc_ref[...] + b_ref[...]).astype(o_ref.dtype)


# --------------------------------------------------------------------------
# Generation-aware configuration helpers
# --------------------------------------------------------------------------
@functools.lru_cache(maxsize=1)
def _chip_config():
    """Best-effort (tensorcores_per_chip, physical_vmem_bytes_per_core)."""
    kind = ""
    try:
        kind = jax.devices()[0].device_kind.lower()
    except Exception:  # pragma: no cover - CPU interpreter fallback etc.
        pass
    # Dual-TensorCore chips Pallas can megacore-shard across: v4, v5p, v7x.
    dual_core = any(tag in kind for tag in ("v4", "v5p", "v7", "7x"))
    # Physical VMEM per TensorCore: 64 MiB on v7x, 128 MiB elsewhere.
    vmem_bytes = (64 << 20) if ("v7" in kind or "7x" in kind) else (128 << 20)
    return (2 if dual_core else 1), vmem_bytes


def _pick_tile(dim, preferred, align):
    """Largest tile <= preferred that divides `dim` and is a multiple of
    `align` (or the full dim as a fallback — full-extent blocks are legal)."""
    if dim <= preferred:
        return dim
    t = (preferred // align) * align
    while t >= align:
        if dim % t == 0:
            return t
        t -= align
    return dim


def _pick_k_tile(K, tm, tn, itemsize, budget_bytes):
    """Full K if the double-buffered x/W blocks fit the budget, else the
    largest 128-multiple divisor of K that does."""
    if 2 * itemsize * K * (tm + tn) <= budget_bytes:
        return K
    tk_max = budget_bytes // (2 * itemsize * (tm + tn))
    tk = (tk_max // 128) * 128
    while tk >= 128:
        if K % tk == 0:
            return tk
        tk -= 128
    return K  # no aligned divisor fits: fall back to full K (rare shapes)


# --------------------------------------------------------------------------
# Forward wrapper
# --------------------------------------------------------------------------
@functools.partial(jax.jit, static_argnames=("mxu_dtype",))
def encoder_forward(x, w_t, b, *, mxu_dtype=None):
    """Pallas equivalent of Encoder.forward: x @ w_t + b.

    x   : (M, K) float32  — batch of inputs
    w_t : (K, N) float32  — weight stored pre-transposed (== PyTorch W^T)
    b   : (N,)   float32
    """
    M, K = x.shape
    K2, N = w_t.shape
    assert K == K2, "inner dims must match"
    itemsize = jnp.dtype(x.dtype).itemsize

    n_cores, phys_vmem = _chip_config()
    # Per-generation cap on scoped VMEM (leave headroom under the physical size).
    vmem_cap = min(int(phys_vmem * 0.75), 96 << 20)

    # ---- Tile selection ---------------------------------------------------
    # Single-TensorCore chips: one N block (single grid step where possible).
    # Dual-TensorCore chips: 256-wide N blocks so megacore gets >=2 "parallel"
    # blocks while still feeding full-width MXU tiles.
    tn = _pick_tile(N, 256 if n_cores >= 2 else N, 128)
    tm = _pick_tile(M, 256, 8)
    assert M % tm == 0 and N % tn == 0, "shapes must tile evenly"

    # K-tiling fallback if the full-K blocks would crowd VMEM (scales with
    # input_shape; matters most on v7x's 64 MiB VMEM).
    k_budget = min(vmem_cap // 2, 24 << 20)
    tk = _pick_k_tile(K, tm, tn, itemsize, k_budget)

    # ---- VMEM budget: double-buffered inputs + output + margin, no 32MiB clamp
    in_block_bytes = itemsize * (tm * tk + tk * tn + tn)        # x, W, bias
    out_block_bytes = itemsize * tm * tn
    required = 2 * in_block_bytes + 2 * out_block_bytes + (2 << 20)
    vmem_limit = min(max(required, 16 << 20), vmem_cap)

    b2 = b.reshape(1, N)

    if tk == K:
        # Single-pass full-K contraction: no accumulator, no init/finalize.
        grid = (M // tm, N // tn)
        kernel = functools.partial(_linear_kernel, mxu_dtype=mxu_dtype)
        in_specs = [
            pl.BlockSpec((tm, K), lambda i, j: (i, 0)),   # x rows, full K
            pl.BlockSpec((K, tn), lambda i, j: (0, j)),   # weight columns
            pl.BlockSpec((1, tn), lambda i, j: (0, j)),   # bias slice
        ]
        out_specs = pl.BlockSpec((tm, tn), lambda i, j: (i, j))
        scratch_shapes = []
        dim_semantics = ("parallel", "parallel")
    else:
        # Large-K fallback: trailing reduction axis with f32 accumulator.
        grid = (M // tm, N // tn, K // tk)
        kernel = functools.partial(_linear_kernel_ktiled, mxu_dtype=mxu_dtype)
        in_specs = [
            pl.BlockSpec((tm, tk), lambda i, j, k: (i, k)),
            pl.BlockSpec((tk, tn), lambda i, j, k: (k, j)),
            pl.BlockSpec((1, tn), lambda i, j, k: (0, j)),
        ]
        out_specs = pl.BlockSpec((tm, tn), lambda i, j, k: (i, j))
        scratch_shapes = [pltpu.VMEM((tm, tn), jnp.float32)]
        dim_semantics = ("parallel", "parallel", "arbitrary")

    return pl.pallas_call(
        kernel,
        out_shape=jax.ShapeDtypeStruct((M, N), x.dtype),
        grid_spec=pl.GridSpec(
            grid=grid,
            in_specs=in_specs,
            out_specs=out_specs,
            scratch_shapes=scratch_shapes,
        ),
        compiler_params=pltpu.CompilerParams(
            dimension_semantics=dim_semantics,
            vmem_limit_bytes=int(vmem_limit),
        ),
    )(x, w_t, b2)


# --------------------------------------------------------------------------
# Parameter init (nn.Linear defaults), weight stored pre-transposed as (K, N)
# --------------------------------------------------------------------------
def init_encoder_params(key, input_shape, hidden_layer):
    """Deterministic init mimicking nn.Linear defaults (uniform +/- 1/sqrt(in)).

    The weight is stored directly in (K, N) = W^T layout so the forward pass
    never pays a per-call HBM transpose.
    """
    kw, kb = jax.random.split(key)
    bound = 1.0 / (input_shape ** 0.5)
    w_t = jax.random.uniform(
        kw, (input_shape, hidden_layer), jnp.float32, -bound, bound
    )
    b = jax.random.uniform(kb, (hidden_layer,), jnp.float32, -bound, bound)
    return w_t, b


if __name__ == "__main__":
    # Small shapes consistent with Encoder(input_shape, hidden_layer)
    batch = 128
    input_shape = 256
    hidden_layer = 512

    key = jax.random.PRNGKey(0)
    kx, kp = jax.random.split(key)

    x = jax.random.normal(kx, (batch, input_shape), jnp.float32)
    w_t, b = init_encoder_params(kp, input_shape, hidden_layer)

    y = encoder_forward(x, w_t, b)          # weight already (K, N): no .T here
    y = jax.block_until_ready(y)

    # Correctness check against plain-JAX reference of the PyTorch forward.
    y_ref = x @ w_t + b
    assert y.shape == (batch, hidden_layer)
    assert jnp.allclose(y, y_ref, atol=1e-4, rtol=1e-4), "mismatch vs reference"

    print("KERNEL_OK")
</pallas_src>

<mosaic_0001>
module attributes {stable_mosaic.version = 11 : i64} {
  func.func @_linear_kernel(%arg0: i32, %arg1: i32, %arg2: memref<128x256xf32, #tpu.memory_space<vmem>>, %arg3: memref<256x512xf32, #tpu.memory_space<vmem>>, %arg4: memref<1x512xf32, #tpu.memory_space<vmem>>, %arg5: memref<128x512xf32, #tpu.memory_space<vmem>>) attributes {dimension_semantics = [#tpu.dimension_semantics<parallel>, #tpu.dimension_semantics<parallel>], iteration_bounds = array<i64: 1, 1>, scalar_prefetch = 0 : i64, scratch_operands = 0 : i64, tpu.core_type = #tpu.core_type<tc>, window_params = [{transform_indices = @transform_0, window_bounds = array<i64: 128, 256>}, {transform_indices = @transform_1, window_bounds = array<i64: 256, 512>}, {transform_indices = @transform_2, window_bounds = array<i64: 1, 512>}, {transform_indices = @transform_3, window_bounds = array<i64: 128, 512>}]} {
    %c0 = arith.constant 0 : index
    %c0_0 = arith.constant 0 : index
    %0 = vector.load %arg2[%c0, %c0_0] : memref<128x256xf32, #tpu.memory_space<vmem>>, vector<128x256xf32>
    %c0_1 = arith.constant 0 : index
    %c0_2 = arith.constant 0 : index
    %1 = vector.load %arg3[%c0_1, %c0_2] : memref<256x512xf32, #tpu.memory_space<vmem>>, vector<256x512xf32>
    %cst = arith.constant dense<0.000000e+00> : vector<128x512xf32>
    %2 = tpu.matmul %0, %1, %cst {dimension_numbers = #tpu.dot_dimension_numbers<[1], [0], [0], [1], [0, 0, 1, 1], [], []>} : vector<128x256xf32>, vector<256x512xf32>, vector<128x512xf32> -> vector<128x512xf32>
    %c0_3 = arith.constant 0 : index
    %c0_4 = arith.constant 0 : index
    %3 = vector.load %arg4[%c0_3, %c0_4] : memref<1x512xf32, #tpu.memory_space<vmem>>, vector<1x512xf32>
    %4 = vector.broadcast %3 : vector<1x512xf32> to vector<128x512xf32>
    %5 = arith.addf %2, %4 : vector<128x512xf32>
    %c0_5 = arith.constant 0 : index
    %c0_6 = arith.constant 0 : index
    %6 = vector.load %arg5[%c0_5, %c0_6] : memref<128x512xf32, #tpu.memory_space<vmem>>, vector<128x512xf32>
    tpu.vector_store %arg5[%c0_5, %c0_6], %5 {strides = array<i32>} : memref<128x512xf32, #tpu.memory_space<vmem>>, vector<128x512xf32>,
    return
  }
  func.func @transform_0(%arg0: i32, %arg1: i32) -> (i32, i32) {
    %c0_i32 = arith.constant 0 : i32
    %c0_i32_0 = arith.constant 0 : i32
    return %arg0, %c0_i32 : i32, i32
  }
  func.func @transform_1(%arg0: i32, %arg1: i32) -> (i32, i32) {
    %c0_i32 = arith.constant 0 : i32
    %c0_i32_0 = arith.constant 0 : i32
    return %c0_i32, %arg1 : i32, i32
  }
  func.func @transform_2(%arg0: i32, %arg1: i32) -> (i32, i32) {
    %c0_i32 = arith.constant 0 : i32
    %c0_i32_0 = arith.constant 0 : i32
    return %c0_i32, %arg1 : i32, i32
  }
  func.func @transform_3(%arg0: i32, %arg1: i32) -> (i32, i32) {
    %c0_i32 = arith.constant 0 : i32
    return %arg0, %arg1 : i32, i32
  }
}

</mosaic_0001>

<llo_original>
// kernel: encoder_forward.1
$region0: #{encoder_forward.1}
  #allocation0 [shape = 'u32[]', space=smem, size = 0x4, offset = 0x4, fixed_abs, tag = 'smem constant byte address 0x4 - core index']
  #allocation1 [shape = 'u32[144,128]{1,0:T(1,128)}', space=vmem, size = 0x12000, scoped, tag = 'internal scratch']
  %s0 = inlined_call_operand.hbm [shape: f32[128,256], index: 0, kind: input, shape index: {}]
  %s1 = inlined_call_operand.hbm [shape: f32[256,512], index: 1, kind: input, shape index: {}]
  %s2 = inlined_call_operand.vmem [shape: f32[1,512], index: 2, kind: input, shape index: {}]
  %s3 = inlined_call_operand.hbm [shape: f32[128,512], index: 3, kind: output, shape index: {}]
  %s4 = sld [smem:[#allocation0]]
  $region30: #{encoder_forward.1} parent=0
    _
  %s6 = ssub.s32 1, %s4
  %s7 = scalar_select 0, %s6, %s4
  $region1: #{encoder_forward.1} parent=0
    #allocation2 [shape = 'u8[131072]{0}', space=vmem, size = 0x20000, scoped, tag = 'input window, operand 0, single buffered']
    #allocation3 [shape = 's32[1]{0}', space=sflag, size = 0x4, scoped, tag = 'scoped memory for encoder_forward.1']
    #allocation4 [shape = 's32[1]{0}', space=sflag, size = 0x4, scoped, tag = 'scoped memory for encoder_forward.1']
    #allocation5 [shape = 'u8[524288]{0}', space=vmem, size = 0x80000, scoped, tag = 'input window, operand 1, single buffered']
    #allocation6 [shape = 's32[1]{0}', space=sflag, size = 0x4, scoped, tag = 'scoped memory for encoder_forward.1']
    #allocation7 [shape = 'u8[262144]{0}', space=vmem, size = 0x40000, scoped, tag = 'output window, operand 0, single buffered']
    %8 = vsyncpa [#allocation3], 0
    %9 = vsyncpa [#allocation6], 0
    %10 = vsyncpa [#allocation4], 0
    // Predicated region
    $region2: #{encoder_forward.1} parent=1 // pred_check
      _
    $region3: #{encoder_forward.1} parent=1 // pred_check_branch
      %12 = sbr.rel (0) target = $region5
    $region4: #{encoder_forward.1} parent=1 // pred_region
      %s14 = ssub.s32 4096, 4096
      %15 = vsyncadd [#allocation3], %s14
      %s16 = sshll.u32 [#allocation2], 4
      %s17 = int_to_ptr.vmem [resolvable:$true] %s16
      %22 = dma.hbm_to_vmem [thread:$0]  %s0, 4096, %s17, [#allocation3], 256, 256, 16
    $region5: #{encoder_forward.1} parent=1 // pred_fallthru
      _
    // Predicated region
    $region6: #{encoder_forward.1} parent=1 // pred_check
      _
    $region7: #{encoder_forward.1} parent=1 // pred_check_branch
      %24 = sbr.rel (0) target = $region9
    $region8: #{encoder_forward.1} parent=1 // pred_region
      %s26 = ssub.s32 16384, 16384
      %27 = vsyncadd [#allocation6], %s26
      %s28 = sshll.u32 [#allocation5], 4
      %s29 = int_to_ptr.vmem [resolvable:$true] %s28
      %34 = dma.hbm_to_vmem [thread:$0]  %s1, 16384, %s29, [#allocation6], 512, 512, 32
    $region9: #{encoder_forward.1} parent=1 // pred_fallthru
      _
    // Predicated region
    $region10: #{encoder_forward.1} parent=1 // pred_check
      _
    $region11: #{encoder_forward.1} parent=1 // pred_check_branch
      %36 = sbr.rel (0) target = $region13
    $region12: #{encoder_forward.1} parent=1 // pred_region
      _
    $region13: #{encoder_forward.1} parent=1 // pred_fallthru
      _
    // Predicated region
    $region14: #{encoder_forward.1} parent=1 // pred_check
      _
    $region15: #{encoder_forward.1} parent=1 // pred_check_branch
      %38 = sbr.rel (0) target = $region17
    $region16: #{encoder_forward.1} parent=1 // pred_region
      %39 = dma.done [#allocation3], 4096
    $region17: #{encoder_forward.1} parent=1 // pred_fallthru
      _
    // Predicated region
    $region18: #{encoder_forward.1} parent=1 // pred_check
      _
    $region19: #{encoder_forward.1} parent=1 // pred_check_branch
      %41 = sbr.rel (0) target = $region21
    $region20: #{encoder_forward.1} parent=1 // pred_region
      %42 = dma.done [#allocation6], 16384
    $region21: #{encoder_forward.1} parent=1 // pred_fallthru
      _
    %v43 = vld [vmem:[#allocation2] sm:$0xff]
    %v44 = vld [vmem:[#allocation2 + $0x8] sm:$0xff]
    %v45 = vld [vmem:[#allocation2 + $0x10] sm:$0xff]
    %v46 = vld [vmem:[#allocation2 + $0x18] sm:$0xff]
    %v47 = vld [vmem:[#allocation2 + $0x20] sm:$0xff]
    %v48 = vld [vmem:[#allocation2 + $0x28] sm:$0xff]
    %v49 = vld [vmem:[#allocation2 + $0x30] sm:$0xff]
    %v50 = vld [vmem:[#allocation2 + $0x38] sm:$0xff]
    %v51 = vld [vmem:[#allocation2 + $0x40] sm:$0xff]
    %v52 = vld [vmem:[#allocation2 + $0x48] sm:$0xff]
    %v53 = vld [vmem:[#allocation2 + $0x50] sm:$0xff]
    %v54 = vld [vmem:[#allocation2 + $0x58] sm:$0xff]
    %v55 = vld [vmem:[#allocation2 + $0x60] sm:$0xff]
    %v56 = vld [vmem:[#allocation2 + $0x68] sm:$0xff]
    %v57 = vld [vmem:[#allocation2 + $0x70] sm:$0xff]
    %v58 = vld [vmem:[#allocation2 + $0x78] sm:$0xff]
    %v59 = vld [vmem:[#allocation2 + $0x80] sm:$0xff]
    %v60 = vld [vmem:[#allocation2 + $0x88] sm:$0xff]
    %v61 = vld [vmem:[#allocation2 + $0x90] sm:$0xff]
    %v62 = vld [vmem:[#allocation2 + $0x98] sm:$0xff]
    %v63 = vld [vmem:[#allocation2 + $0xa0] sm:$0xff]
    %v64 = vld [vmem:[#allocation2 + $0xa8] sm:$0xff]
    %v65 = vld [vmem:[#allocation2 + $0xb0] sm:$0xff]
    %v66 = vld [vmem:[#allocation2 + $0xb8] sm:$0xff]
    %v67 = vld [vmem:[#allocation2 + $0xc0] sm:$0xff]
    %v68 = vld [vmem:[#allocation2 + $0xc8] sm:$0xff]
    %v69 = vld [vmem:[#allocation2 + $0xd0] sm:$0xff]
    %v70 = vld [vmem:[#allocation2 + $0xd8] sm:$0xff]
    %v71 = vld [vmem:[#allocation2 + $0xe0] sm:$0xff]
    %v72 = vld [vmem:[#allocation2 + $0xe8] sm:$0xff]
    %v73 = vld [vmem:[#allocation2 + $0xf0] sm:$0xff]
    %v74 = vld [vmem:[#allocation2 + $0xf8] sm:$0xff]
    %v75 = vld [vmem:[#allocation5] sm:$0xff]
    %v76 = vld [vmem:[#allocation5 + $0x8] sm:$0xff]
    %v77 = vld [vmem:[#allocation5 + $0x10] sm:$0xff]
    %v78 = vld [vmem:[#allocation5 + $0x18] sm:$0xff]
    %v79 = vld [vmem:[#allocation5 + $0x20] sm:$0xff]
    %v80 = vld [vmem:[#allocation5 + $0x28] sm:$0xff]
    %v81 = vld [vmem:[#allocation5 + $0x30] sm:$0xff]
    %v82 = vld [vmem:[#allocation5 + $0x38] sm:$0xff]
    %v83 = vld [vmem:[#allocation5 + $0x40] sm:$0xff]
    %v84 = vld [vmem:[#allocation5 + $0x48] sm:$0xff]
    %v85 = vld [vmem:[#allocation5 + $0x50] sm:$0xff]
    %v86 = vld [vmem:[#allocation5 + $0x58] sm:$0xff]
    %v87 = vld [vmem:[#allocation5 + $0x60] sm:$0xff]
    %v88 = vld [vmem:[#allocation5 + $0x68] sm:$0xff]
    %v89 = vld [vmem:[#allocation5 + $0x70] sm:$0xff]
    %v90 = vld [vmem:[#allocation5 + $0x78] sm:$0xff]
    %v91 = vld [vmem:[#allocation5 + $0x80] sm:$0xff]
    %v92 = vld [vmem:[#allocation5 + $0x88] sm:$0xff]
    %v93 = vld [vmem:[#allocation5 + $0x90] sm:$0xff]
    %v94 = vld [vmem:[#allocation5 + $0x98] sm:$0xff]
    %v95 = vld [vmem:[#allocation5 + $0xa0] sm:$0xff]
    %v96 = vld [vmem:[#allocation5 + $0xa8] sm:$0xff]
    %v97 = vld [vmem:[#allocation5 + $0xb0] sm:$0xff]
    %v98 = vld [vmem:[#allocation5 + $0xb8] sm:$0xff]
    %v99 = vld [vmem:[#allocation5 + $0xc0] sm:$0xff]
    %v100 = vld [vmem:[#allocation5 + $0xc8] sm:$0xff]
    %v101 = vld [vmem:[#allocation5 + $0xd0] sm:$0xff]
    %v102 = vld [vmem:[#allocation5 + $0xd8] sm:$0xff]
    %v103 = vld [vmem:[#allocation5 + $0xe0] sm:$0xff]
    %v104 = vld [vmem:[#allocation5 + $0xe8] sm:$0xff]
    %v105 = vld [vmem:[#allocation5 + $0xf0] sm:$0xff]
    %v106 = vld [vmem:[#allocation5 + $0xf8] sm:$0xff]
    %v107 = vld [vmem:[#allocation5 + $0x100] sm:$0xff]
    %v108 = vld [vmem:[#allocation5 + $0x108] sm:$0xff]
    %v109 = vld [vmem:[#allocation5 + $0x110] sm:$0xff]
    %v110 = vld [vmem:[#allocation5 + $0x118] sm:$0xff]
    %v111 = vld [vmem:[#allocation5 + $0x120] sm:$0xff]
    %v112 = vld [vmem:[#allocation5 + $0x128] sm:$0xff]
    %v113 = vld [vmem:[#allocation5 + $0x130] sm:$0xff]
    %v114 = vld [vmem:[#allocation5 + $0x138] sm:$0xff]
    %v115 = vld [vmem:[#allocation5 + $0x140] sm:$0xff]
    %v116 = vld [vmem:[#allocation5 + $0x148] sm:$0xff]
    %v117 = vld [vmem:[#allocation5 + $0x150] sm:$0xff]
    %v118 = vld [vmem:[#allocation5 + $0x158] sm:$0xff]
    %v119 = vld [vmem:[#allocation5 + $0x160] sm:$0xff]
    %v120 = vld [vmem:[#allocation5 + $0x168] sm:$0xff]
    %v121 = vld [vmem:[#allocation5 + $0x170] sm:$0xff]
    %v122 = vld [vmem:[#allocation5 + $0x178] sm:$0xff]
    %v123 = vld [vmem:[#allocation5 + $0x180] sm:$0xff]
    %v124 = vld [vmem:[#allocation5 + $0x188] sm:$0xff]
    %v125 = vld [vmem:[#allocation5 + $0x190] sm:$0xff]
    %v126 = vld [vmem:[#allocation5 + $0x198] sm:$0xff]
    %v127 = vld [vmem:[#allocation5 + $0x1a0] sm:$0xff]
    %v128 = vld [vmem:[#allocation5 + $0x1a8] sm:$0xff]
    %v129 = vld [vmem:[#allocation5 + $0x1b0] sm:$0xff]
    %v130 = vld [vmem:[#allocation5 + $0x1b8] sm:$0xff]
    %v131 = vld [vmem:[#allocation5 + $0x1c0] sm:$0xff]
    %v132 = vld [vmem:[#allocation5 + $0x1c8] sm:$0xff]
    %v133 = vld [vmem:[#allocation5 + $0x1d0] sm:$0xff]
    %v134 = vld [vmem:[#allocation5 + $0x1d8] sm:$0xff]
    %v135 = vld [vmem:[#allocation5 + $0x1e0] sm:$0xff]
    %v136 = vld [vmem:[#allocation5 + $0x1e8] sm:$0xff]
    %v137 = vld [vmem:[#allocation5 + $0x1f0] sm:$0xff]
    %v138 = vld [vmem:[#allocation5 + $0x1f8] sm:$0xff]
    %v139 = vld [vmem:[#allocation5 + $0x200] sm:$0xff]
    %v140 = vld [vmem:[#allocation5 + $0x208] sm:$0xff]
    %v141 = vld [vmem:[#allocation5 + $0x210] sm:$0xff]
    %v142 = vld [vmem:[#allocation5 + $0x218] sm:$0xff]
    %v143 = vld [vmem:[#allocation5 + $0x220] sm:$0xff]
    %v144 = vld [vmem:[#allocation5 + $0x228] sm:$0xff]
    %v145 = vld [vmem:[#allocation5 + $0x230] sm:$0xff]
    %v146 = vld [vmem:[#allocation5 + $0x238] sm:$0xff]
    %v147 = vld [vmem:[#allocation5 + $0x240] sm:$0xff]
    %v148 = vld [vmem:[#allocation5 + $0x248] sm:$0xff]
    %v149 = vld [vmem:[#allocation5 + $0x250] sm:$0xff]
    %v150 = vld [vmem:[#allocation5 + $0x258] sm:$0xff]
    %v151 = vld [vmem:[#allocation5 + $0x260] sm:$0xff]
    %v152 = vld [vmem:[#allocation5 + $0x268] sm:$0xff]
    %v153 = vld [vmem:[#allocation5 + $0x270] sm:$0xff]
    %v154 = vld [vmem:[#allocation5 + $0x278] sm:$0xff]
    %v155 = vld [vmem:[#allocation5 + $0x280] sm:$0xff]
    %v156 = vld [vmem:[#allocation5 + $0x288] sm:$0xff]
    %v157 = vld [vmem:[#allocation5 + $0x290] sm:$0xff]
    %v158 = vld [vmem:[#allocation5 + $0x298] sm:$0xff]
    %v159 = vld [vmem:[#allocation5 + $0x2a0] sm:$0xff]
    %v160 = vld [vmem:[#allocation5 + $0x2a8] sm:$0xff]
    %v161 = vld [vmem:[#allocation5 + $0x2b0] sm:$0xff]
    %v162 = vld [vmem:[#allocation5 + $0x2b8] sm:$0xff]
    %v163 = vld [vmem:[#allocation5 + $0x2c0] sm:$0xff]
    %v164 = vld [vmem:[#allocation5 + $0x2c8] sm:$0xff]
    %v165 = vld [vmem:[#allocation5 + $0x2d0] sm:$0xff]
    %v166 = vld [vmem:[#allocation5 + $0x2d8] sm:$0xff]
    %v167 = vld [vmem:[#allocation5 + $0x2e0] sm:$0xff]
    %v168 = vld [vmem:[#allocation5 + $0x2e8] sm:$0xff]
    %v169 = vld [vmem:[#allocation5 + $0x2f0] sm:$0xff]
    %v170 = vld [vmem:[#allocation5 + $0x2f8] sm:$0xff]
    %v171 = vld [vmem:[#allocation5 + $0x300] sm:$0xff]
    %v172 = vld [vmem:[#allocation5 + $0x308] sm:$0xff]
    %v173 = vld [vmem:[#allocation5 + $0x310] sm:$0xff]
    %v174 = vld [vmem:[#allocation5 + $0x318] sm:$0xff]
    %v175 = vld [vmem:[#allocation5 + $0x320] sm:$0xff]
    %v176 = vld [vmem:[#allocation5 + $0x328] sm:$0xff]
    %v177 = vld [vmem:[#allocation5 + $0x330] sm:$0xff]
    %v178 = vld [vmem:[#allocation5 + $0x338] sm:$0xff]
    %v179 = vld [vmem:[#allocation5 + $0x340] sm:$0xff]
    %v180 = vld [vmem:[#allocation5 + $0x348] sm:$0xff]
    %v181 = vld [vmem:[#allocation5 + $0x350] sm:$0xff]
    %v182 = vld [vmem:[#allocation5 + $0x358] sm:$0xff]
    %v183 = vld [vmem:[#allocation5 + $0x360] sm:$0xff]
    %v184 = vld [vmem:[#allocation5 + $0x368] sm:$0xff]
    %v185 = vld [vmem:[#allocation5 + $0x370] sm:$0xff]
    %v186 = vld [vmem:[#allocation5 + $0x378] sm:$0xff]
    %v187 = vld [vmem:[#allocation5 + $0x380] sm:$0xff]
    %v188 = vld [vmem:[#allocation5 + $0x388] sm:$0xff]
    %v189 = vld [vmem:[#allocation5 + $0x390] sm:$0xff]
    %v190 = vld [vmem:[#allocation5 + $0x398] sm:$0xff]
    %v191 = vld [vmem:[#allocation5 + $0x3a0] sm:$0xff]
    %v192 = vld [vmem:[#allocation5 + $0x3a8] sm:$0xff]
    %v193 = vld [vmem:[#allocation5 + $0x3b0] sm:$0xff]
    %v194 = vld [vmem:[#allocation5 + $0x3b8] sm:$0xff]
    %v195 = vld [vmem:[#allocation5 + $0x3c0] sm:$0xff]
    %v196 = vld [vmem:[#allocation5 + $0x3c8] sm:$0xff]
    %v197 = vld [vmem:[#allocation5 + $0x3d0] sm:$0xff]
    %v198 = vld [vmem:[#allocation5 + $0x3d8] sm:$0xff]
    %v199 = vld [vmem:[#allocation5 + $0x3e0] sm:$0xff]
    %v200 = vld [vmem:[#allocation5 + $0x3e8] sm:$0xff]
    %v201 = vld [vmem:[#allocation5 + $0x3f0] sm:$0xff]
    %v202 = vld [vmem:[#allocation5 + $0x3f8] sm:$0xff]
    %v203 = vld [vmem:[%s2] sm:$0xf]
    %v205 = vlaneseq
    %v206 = vshrl.u32 %v205, 7
    %v207 = vsub.s32 0, %v206
    %v208 = vrot.slane %v203, %v207
    %v209 = vlaneseq
    %v210 = vshrl.u32 %v209, 7
    %v211 = vsub.s32 1, %v210
    %v212 = vrot.slane %v203, %v211
    %v213 = vlaneseq
    %v214 = vshrl.u32 %v213, 7
    %v215 = vsub.s32 2, %v214
    %v216 = vrot.slane %v203, %v215
    %v217 = vlaneseq
    %v218 = vshrl.u32 %v217, 7
    %v219 = vsub.s32 3, %v218
    %v220 = vrot.slane %v203, %v219
    %225 = vmatprep.subr.mxu0 %v76
    %226 = vmatpush1.msra.mxu0 %v75
    %227 = vmatprep.subr.mxu0 %v80
    %228 = vmatpush1.msra.mxu0 %v79
    %229 = vmatprep.subr.mxu0 %v84
    %230 = vmatpush1.msra.mxu0 %v83
    %231 = vmatprep.subr.mxu0 %v88
    %232 = vmatpush1.msra.mxu0 %v87
    %233 = vmatprep.subr.mxu0 %v92
    %234 = vmatpush1.msra.mxu0 %v91
    %235 = vmatprep.subr.mxu0 %v96
    %236 = vmatpush1.msra.mxu0 %v95
    %237 = vmatprep.subr.mxu0 %v100
    %238 = vmatpush1.msra.mxu0 %v99
    %239 = vmatprep.subr.mxu0 %v104
    %240 = vmatpush1.msra.mxu0 %v103
    %241 = vmatprep.subr.mxu0 %v108
    %242 = vmatpush1.msra.mxu0 %v107
    %243 = vmatprep.subr.mxu0 %v112
    %244 = vmatpush1.msra.mxu0 %v111
    %245 = vmatprep.subr.mxu0 %v116
    %246 = vmatpush1.msra.mxu0 %v115
    %247 = vmatprep.subr.mxu0 %v120
    %248 = vmatpush1.msra.mxu0 %v119
    %249 = vmatprep.subr.mxu0 %v124
    %250 = vmatpush1.msra.mxu0 %v123
    %251 = vmatprep.subr.mxu0 %v128
    %252 = vmatpush1.msra.mxu0 %v127
    %253 = vmatprep.subr.mxu0 %v132
    %254 = vmatpush1.msra.mxu0 %v131
    %255 = vmatprep.subr.mxu0 %v136
    %256 = vmatpush1.msra.mxu0 %v135
    %257 = vmatprep.subr.mxu0 %v140
    %258 = vmatpush1.msra.mxu0 %v139
    %259 = vmatprep.subr.mxu0 %v144
    %260 = vmatpush1.msra.mxu0 %v143
    %261 = vmatprep.subr.mxu0 %v148
    %262 = vmatpush1.msra.mxu0 %v147
    %263 = vmatprep.subr.mxu0 %v152
    %264 = vmatpush1.msra.mxu0 %v151
    %265 = vmatprep.subr.mxu0 %v156
    %266 = vmatpush1.msra.mxu0 %v155
    %267 = vmatprep.subr.mxu0 %v160
    %268 = vmatpush1.msra.mxu0 %v159
    %269 = vmatprep.subr.mxu0 %v164
    %270 = vmatpush1.msra.mxu0 %v163
    %271 = vmatprep.subr.mxu0 %v168
    %272 = vmatpush1.msra.mxu0 %v167
    %273 = vmatprep.subr.mxu0 %v172
    %274 = vmatpush1.msra.mxu0 %v171
    %275 = vmatprep.subr.mxu0 %v176
    %276 = vmatpush1.msra.mxu0 %v175
    %277 = vmatprep.subr.mxu0 %v180
    %278 = vmatpush1.msra.mxu0 %v179
    %279 = vmatprep.subr.mxu0 %v184
    %280 = vmatpush1.msra.mxu0 %v183
    %281 = vmatprep.subr.mxu0 %v188
    %282 = vmatpush1.msra.mxu0 %v187
    %283 = vmatprep.subr.mxu0 %v192
    %284 = vmatpush1.msra.mxu0 %v191
    %285 = vmatprep.subr.mxu0 %v196
    %286 = vmatpush1.msra.mxu0 %v195
    %287 = vmatprep.subr.mxu0 %v200
    %288 = vmatpush1.msra.mxu0 %v199
    %289 = vmatprep.mubr.f32.mxu0 %v44
    %290 = vmatmul.mubr.f32.gmra.mrb[0].mxu0 %v43
    %v291 = vpop.f32.mrb[0].mxu0
    %v292 = vadd.f32 %v208, %v291
    %v293 = vpop.f32.mrb[0].mxu0
    %v294 = vadd.f32 %v212, %v293
    %295 = vmatprep.mubr.f32.mxu0 %v46
    %296 = vmatmul.mubr.f32.gmra.mrb[0].mxu0 %v45
    %v297 = vpop.f32.mrb[0].mxu0
    %v298 = vadd.f32 %v208, %v297
    %v299 = vpop.f32.mrb[0].mxu0
    %v300 = vadd.f32 %v212, %v299
    %301 = vmatprep.mubr.f32.mxu0 %v48
    %302 = vmatmul.mubr.f32.gmra.mrb[0].mxu0 %v47
    %v303 = vpop.f32.mrb[0].mxu0
    %v304 = vadd.f32 %v208, %v303
    %v305 = vpop.f32.mrb[0].mxu0
    %v306 = vadd.f32 %v212, %v305
    %307 = vmatprep.mubr.f32.mxu0 %v50
    %308 = vmatmul.mubr.f32.gmra.mrb[0].mxu0 %v49
    %v309 = vpop.f32.mrb[0].mxu0
    %v310 = vadd.f32 %v208, %v309
    %v311 = vpop.f32.mrb[0].mxu0
    %v312 = vadd.f32 %v212, %v311
    %313 = vmatprep.mubr.f32.mxu0 %v52
    %314 = vmatmul.mubr.f32.gmra.mrb[0].mxu0 %v51
    %v315 = vpop.f32.mrb[0].mxu0
    %v316 = vadd.f32 %v208, %v315
    %v317 = vpop.f32.mrb[0].mxu0
    %v318 = vadd.f32 %v212, %v317
    %319 = vmatprep.mubr.f32.mxu0 %v54
    %320 = vmatmul.mubr.f32.gmra.mrb[0].mxu0 %v53
    %v321 = vpop.f32.mrb[0].mxu0
    %v322 = vadd.f32 %v208, %v321
    %v323 = vpop.f32.mrb[0].mxu0
    %v324 = vadd.f32 %v212, %v323
    %325 = vmatprep.mubr.f32.mxu0 %v56
    %326 = vmatmul.mubr.f32.gmra.mrb[0].mxu0 %v55
    %v327 = vpop.f32.mrb[0].mxu0
    %v328 = vadd.f32 %v208, %v327
    %v329 = vpop.f32.mrb[0].mxu0
    %v330 = vadd.f32 %v212, %v329
    %331 = vmatprep.mubr.f32.mxu0 %v58
    %332 = vmatmul.mubr.f32.gmra.mrb[0].mxu0 %v57
    %v333 = vpop.f32.mrb[0].mxu0
    %v334 = vadd.f32 %v208, %v333
    %v335 = vpop.f32.mrb[0].mxu0
    %v336 = vadd.f32 %v212, %v335
    %337 = vmatprep.mubr.f32.mxu0 %v60
    %338 = vmatmul.mubr.f32.gmra.mrb[0].mxu0 %v59
    %v339 = vpop.f32.mrb[0].mxu0
    %v340 = vadd.f32 %v208, %v339
    %v341 = vpop.f32.mrb[0].mxu0
    %v342 = vadd.f32 %v212, %v341
    %343 = vmatprep.mubr.f32.mxu0 %v62
    %344 = vmatmul.mubr.f32.gmra.mrb[0].mxu0 %v61
    %v345 = vpop.f32.mrb[0].mxu0
    %v346 = vadd.f32 %v208, %v345
    %v347 = vpop.f32.mrb[0].mxu0
    %v348 = vadd.f32 %v212, %v347
    %349 = vmatprep.mubr.f32.mxu0 %v64
    %350 = vmatmul.mubr.f32.gmra.mrb[0].mxu0 %v63
    %v351 = vpop.f32.mrb[0].mxu0
    %v352 = vadd.f32 %v208, %v351
    %v353 = vpop.f32.mrb[0].mxu0
    %v354 = vadd.f32 %v212, %v353
    %355 = vmatprep.mubr.f32.mxu0 %v66
    %356 = vmatmul.mubr.f32.gmra.mrb[0].mxu0 %v65
    %v357 = vpop.f32.mrb[0].mxu0
    %v358 = vadd.f32 %v208, %v357
    %v359 = vpop.f32.mrb[0].mxu0
    %v360 = vadd.f32 %v212, %v359
    %361 = vmatprep.mubr.f32.mxu0 %v68
    %362 = vmatmul.mubr.f32.gmra.mrb[0].mxu0 %v67
    %v363 = vpop.f32.mrb[0].mxu0
    %v364 = vadd.f32 %v208, %v363
    %v365 = vpop.f32.mrb[0].mxu0
    %v366 = vadd.f32 %v212, %v365
    %367 = vmatprep.mubr.f32.mxu0 %v70
    %368 = vmatmul.mubr.f32.gmra.mrb[0].mxu0 %v69
    %v369 = vpop.f32.mrb[0].mxu0
    %v370 = vadd.f32 %v208, %v369
    %v371 = vpop.f32.mrb[0].mxu0
    %v372 = vadd.f32 %v212, %v371
    %373 = vmatprep.mubr.f32.mxu0 %v72
    %374 = vmatmul.mubr.f32.gmra.mrb[0].mxu0 %v71
    %v375 = vpop.f32.mrb[0].mxu0
    %v376 = vadd.f32 %v208, %v375
    %v377 = vpop.f32.mrb[0].mxu0
    %v378 = vadd.f32 %v212, %v377
    %379 = vmatprep.mubr.f32.mxu0 %v74
    %380 = vmatmul.mubr.f32.gmra.mrb[0].mxu0 %v73
    %v381 = vpop.f32.mrb[0].mxu0
    %v382 = vadd.f32 %v208, %v381
    %v383 = vpop.f32.mrb[0].mxu0
    %v384 = vadd.f32 %v212, %v383
    %385 = vdwg.mxu0
    %386 = vmatprep.subr.mxu0 %v78
    %387 = vmatpush1.msra.mxu0 %v77
    %388 = vmatprep.subr.mxu0 %v82
    %389 = vmatpush1.msra.mxu0 %v81
    %390 = vmatprep.subr.mxu0 %v86
    %391 = vmatpush1.msra.mxu0 %v85
    %392 = vmatprep.subr.mxu0 %v90
    %393 = vmatpush1.msra.mxu0 %v89
    %394 = vmatprep.subr.mxu0 %v94
    %395 = vmatpush1.msra.mxu0 %v93
    %396 = vmatprep.subr.mxu0 %v98
    %397 = vmatpush1.msra.mxu0 %v97
    %398 = vmatprep.subr.mxu0 %v102
    %399 = vmatpush1.msra.mxu0 %v101
    %400 = vmatprep.subr.mxu0 %v106
    %401 = vmatpush1.msra.mxu0 %v105
    %402 = vmatprep.subr.mxu0 %v110
    %403 = vmatpush1.msra.mxu0 %v109
    %404 = vmatprep.subr.mxu0 %v114
    %405 = vmatpush1.msra.mxu0 %v113
    %406 = vmatprep.subr.mxu0 %v118
    %407 = vmatpush1.msra.mxu0 %v117
    %408 = vmatprep.subr.mxu0 %v122
    %409 = vmatpush1.msra.mxu0 %v121
    %410 = vmatprep.subr.mxu0 %v126
    %411 = vmatpush1.msra.mxu0 %v125
    %412 = vmatprep.subr.mxu0 %v130
    %413 = vmatpush1.msra.mxu0 %v129
    %414 = vmatprep.subr.mxu0 %v134
    %415 = vmatpush1.msra.mxu0 %v133
    %416 = vmatprep.subr.mxu0 %v138
    %417 = vmatpush1.msra.mxu0 %v137
    %418 = vmatprep.subr.mxu0 %v142
    %419 = vmatpush1.msra.mxu0 %v141
    %420 = vmatprep.subr.mxu0 %v146
    %421 = vmatpush1.msra.mxu0 %v145
    %422 = vmatprep.subr.mxu0 %v150
    %423 = vmatpush1.msra.mxu0 %v149
    %424 = vmatprep.subr.mxu0 %v154
    %425 = vmatpush1.msra.mxu0 %v153
    %426 = vmatprep.subr.mxu0 %v158
    %427 = vmatpush1.msra.mxu0 %v157
    %428 = vmatprep.subr.mxu0 %v162
    %429 = vmatpush1.msra.mxu0 %v161
    %430 = vmatprep.subr.mxu0 %v166
    %431 = vmatpush1.msra.mxu0 %v165
    %432 = vmatprep.subr.mxu0 %v170
    %433 = vmatpush1.msra.mxu0 %v169
    %434 = vmatprep.subr.mxu0 %v174
    %435 = vmatpush1.msra.mxu0 %v173
    %436 = vmatprep.subr.mxu0 %v178
    %437 = vmatpush1.msra.mxu0 %v177
    %438 = vmatprep.subr.mxu0 %v182
    %439 = vmatpush1.msra.mxu0 %v181
    %440 = vmatprep.subr.mxu0 %v186
    %441 = vmatpush1.msra.mxu0 %v185
    %442 = vmatprep.subr.mxu0 %v190
    %443 = vmatpush1.msra.mxu0 %v189
    %444 = vmatprep.subr.mxu0 %v194
    %445 = vmatpush1.msra.mxu0 %v193
    %446 = vmatprep.subr.mxu0 %v198
    %447 = vmatpush1.msra.mxu0 %v197
    %448 = vmatprep.subr.mxu0 %v202
    %449 = vmatpush1.msra.mxu0 %v201
    %450 = vmatprep.mubr.f32.mxu0 %v44
    %451 = vmatmul.mubr.f32.gmra.mrb[0].mxu0 %v43
    %v452 = vpop.f32.mrb[0].mxu0
    %v453 = vadd.f32 %v216, %v452
    %v454 = vpop.f32.mrb[0].mxu0
    %v455 = vadd.f32 %v220, %v454
    %456 = vmatprep.mubr.f32.mxu0 %v46
    %457 = vmatmul.mubr.f32.gmra.mrb[0].mxu0 %v45
    %v458 = vpop.f32.mrb[0].mxu0
    %v459 = vadd.f32 %v216, %v458
    %v460 = vpop.f32.mrb[0].mxu0
    %v461 = vadd.f32 %v220, %v460
    %462 = vmatprep.mubr.f32.mxu0 %v48
    %463 = vmatmul.mubr.f32.gmra.mrb[0].mxu0 %v47
    %v464 = vpop.f32.mrb[0].mxu0
    %v465 = vadd.f32 %v216, %v464
    %v466 = vpop.f32.mrb[0].mxu0
    %v467 = vadd.f32 %v220, %v466
    %468 = vmatprep.mubr.f32.mxu0 %v50
    %469 = vmatmul.mubr.f32.gmra.mrb[0].mxu0 %v49
    %v470 = vpop.f32.mrb[0].mxu0
    %v471 = vadd.f32 %v216, %v470
    %v472 = vpop.f32.mrb[0].mxu0
    %v473 = vadd.f32 %v220, %v472
    %474 = vmatprep.mubr.f32.mxu0 %v52
    %475 = vmatmul.mubr.f32.gmra.mrb[0].mxu0 %v51
    %v476 = vpop.f32.mrb[0].mxu0
    %v477 = vadd.f32 %v216, %v476
    %v478 = vpop.f32.mrb[0].mxu0
    %v479 = vadd.f32 %v220, %v478
    %480 = vmatprep.mubr.f32.mxu0 %v54
    %481 = vmatmul.mubr.f32.gmra.mrb[0].mxu0 %v53
    %v482 = vpop.f32.mrb[0].mxu0
    %v483 = vadd.f32 %v216, %v482
    %v484 = vpop.f32.mrb[0].mxu0
    %v485 = vadd.f32 %v220, %v484
    %486 = vmatprep.mubr.f32.mxu0 %v56
    %487 = vmatmul.mubr.f32.gmra.mrb[0].mxu0 %v55
    %v488 = vpop.f32.mrb[0].mxu0
    %v489 = vadd.f32 %v216, %v488
    %v490 = vpop.f32.mrb[0].mxu0
    %v491 = vadd.f32 %v220, %v490
    %492 = vmatprep.mubr.f32.mxu0 %v58
    %493 = vmatmul.mubr.f32.gmra.mrb[0].mxu0 %v57
    %v494 = vpop.f32.mrb[0].mxu0
    %v495 = vadd.f32 %v216, %v494
    %v496 = vpop.f32.mrb[0].mxu0
    %v497 = vadd.f32 %v220, %v496
    %498 = vmatprep.mubr.f32.mxu0 %v60
    %499 = vmatmul.mubr.f32.gmra.mrb[0].mxu0 %v59
    %v500 = vpop.f32.mrb[0].mxu0
    %v501 = vadd.f32 %v216, %v500
    %v502 = vpop.f32.mrb[0].mxu0
    %v503 = vadd.f32 %v220, %v502
    %504 = vmatprep.mubr.f32.mxu0 %v62
    %505 = vmatmul.mubr.f32.gmra.mrb[0].mxu0 %v61
    %v506 = vpop.f32.mrb[0].mxu0
    %v507 = vadd.f32 %v216, %v506
    %v508 = vpop.f32.mrb[0].mxu0
    %v509 = vadd.f32 %v220, %v508
    %510 = vmatprep.mubr.f32.mxu0 %v64
    %511 = vmatmul.mubr.f32.gmra.mrb[0].mxu0 %v63
    %v512 = vpop.f32.mrb[0].mxu0
    %v513 = vadd.f32 %v216, %v512
    %v514 = vpop.f32.mrb[0].mxu0
    %v515 = vadd.f32 %v220, %v514
    %516 = vmatprep.mubr.f32.mxu0 %v66
    %517 = vmatmul.mubr.f32.gmra.mrb[0].mxu0 %v65
    %v518 = vpop.f32.mrb[0].mxu0
    %v519 = vadd.f32 %v216, %v518
    %v520 = vpop.f32.mrb[0].mxu0
    %v521 = vadd.f32 %v220, %v520
    %522 = vmatprep.mubr.f32.mxu0 %v68
    %523 = vmatmul.mubr.f32.gmra.mrb[0].mxu0 %v67
    %v524 = vpop.f32.mrb[0].mxu0
    %v525 = vadd.f32 %v216, %v524
    %v526 = vpop.f32.mrb[0].mxu0
    %v527 = vadd.f32 %v220, %v526
    %528 = vmatprep.mubr.f32.mxu0 %v70
    %529 = vmatmul.mubr.f32.gmra.mrb[0].mxu0 %v69
    %v530 = vpop.f32.mrb[0].mxu0
    %v531 = vadd.f32 %v216, %v530
    %v532 = vpop.f32.mrb[0].mxu0
    %v533 = vadd.f32 %v220, %v532
    %534 = vmatprep.mubr.f32.mxu0 %v72
    %535 = vmatmul.mubr.f32.gmra.mrb[0].mxu0 %v71
    %v536 = vpop.f32.mrb[0].mxu0
    %v537 = vadd.f32 %v216, %v536
    %v538 = vpop.f32.mrb[0].mxu0
    %v539 = vadd.f32 %v220, %v538
    %540 = vmatprep.mubr.f32.mxu0 %v74
    %541 = vmatmul.mubr.f32.gmra.mrb[0].mxu0 %v73
    %v542 = vpop.f32.mrb[0].mxu0
    %v543 = vadd.f32 %v216, %v542
    %v544 = vpop.f32.mrb[0].mxu0
    %v545 = vadd.f32 %v220, %v544
    %546 = vdwg.mxu0
    %547 = vst [vmem:[#allocation7] sm:$0xff] %v292
    %548 = vst [vmem:[#allocation7 + $0x8] sm:$0xff] %v294
    %549 = vst [vmem:[#allocation7 + $0x10] sm:$0xff] %v453
    %550 = vst [vmem:[#allocation7 + $0x18] sm:$0xff] %v455
    %551 = vst [vmem:[#allocation7 + $0x20] sm:$0xff] %v298
    %552 = vst [vmem:[#allocation7 + $0x28] sm:$0xff] %v300
    %553 = vst [vmem:[#allocation7 + $0x30] sm:$0xff] %v459
    %554 = vst [vmem:[#allocation7 + $0x38] sm:$0xff] %v461
    %555 = vst [vmem:[#allocation7 + $0x40] sm:$0xff] %v304
    %556 = vst [vmem:[#allocation7 + $0x48] sm:$0xff] %v306
    %557 = vst [vmem:[#allocation7 + $0x50] sm:$0xff] %v465
    %558 = vst [vmem:[#allocation7 + $0x58] sm:$0xff] %v467
    %559 = vst [vmem:[#allocation7 + $0x60] sm:$0xff] %v310
    %560 = vst [vmem:[#allocation7 + $0x68] sm:$0xff] %v312
    %561 = vst [vmem:[#allocation7 + $0x70] sm:$0xff] %v471
    %562 = vst [vmem:[#allocation7 + $0x78] sm:$0xff] %v473
    %563 = vst [vmem:[#allocation7 + $0x80] sm:$0xff] %v316
    %564 = vst [vmem:[#allocation7 + $0x88] sm:$0xff] %v318
    %565 = vst [vmem:[#allocation7 + $0x90] sm:$0xff] %v477
    %566 = vst [vmem:[#allocation7 + $0x98] sm:$0xff] %v479
    %567 = vst [vmem:[#allocation7 + $0xa0] sm:$0xff] %v322
    %568 = vst [vmem:[#allocation7 + $0xa8] sm:$0xff] %v324
    %569 = vst [vmem:[#allocation7 + $0xb0] sm:$0xff] %v483
    %570 = vst [vmem:[#allocation7 + $0xb8] sm:$0xff] %v485
    %571 = vst [vmem:[#allocation7 + $0xc0] sm:$0xff] %v328
    %572 = vst [vmem:[#allocation7 + $0xc8] sm:$0xff] %v330
    %573 = vst [vmem:[#allocation7 + $0xd0] sm:$0xff] %v489
    %574 = vst [vmem:[#allocation7 + $0xd8] sm:$0xff] %v491
    %575 = vst [vmem:[#allocation7 + $0xe0] sm:$0xff] %v334
    %576 = vst [vmem:[#allocation7 + $0xe8] sm:$0xff] %v336
    %577 = vst [vmem:[#allocation7 + $0xf0] sm:$0xff] %v495
    %578 = vst [vmem:[#allocation7 + $0xf8] sm:$0xff] %v497
    %579 = vst [vmem:[#allocation7 + $0x100] sm:$0xff] %v340
    %580 = vst [vmem:[#allocation7 + $0x108] sm:$0xff] %v342
    %581 = vst [vmem:[#allocation7 + $0x110] sm:$0xff] %v501
    %582 = vst [vmem:[#allocation7 + $0x118] sm:$0xff] %v503
    %583 = vst [vmem:[#allocation7 + $0x120] sm:$0xff] %v346
    %584 = vst [vmem:[#allocation7 + $0x128] sm:$0xff] %v348
    %585 = vst [vmem:[#allocation7 + $0x130] sm:$0xff] %v507
    %586 = vst [vmem:[#allocation7 + $0x138] sm:$0xff] %v509
    %587 = vst [vmem:[#allocation7 + $0x140] sm:$0xff] %v352
    %588 = vst [vmem:[#allocation7 + $0x148] sm:$0xff] %v354
    %589 = vst [vmem:[#allocation7 + $0x150] sm:$0xff] %v513
    %590 = vst [vmem:[#allocation7 + $0x158] sm:$0xff] %v515
    %591 = vst [vmem:[#allocation7 + $0x160] sm:$0xff] %v358
    %592 = vst [vmem:[#allocation7 + $0x168] sm:$0xff] %v360
    %593 = vst [vmem:[#allocation7 + $0x170] sm:$0xff] %v519
    %594 = vst [vmem:[#allocation7 + $0x178] sm:$0xff] %v521
    %595 = vst [vmem:[#allocation7 + $0x180] sm:$0xff] %v364
    %596 = vst [vmem:[#allocation7 + $0x188] sm:$0xff] %v366
    %597 = vst [vmem:[#allocation7 + $0x190] sm:$0xff] %v525
    %598 = vst [vmem:[#allocation7 + $0x198] sm:$0xff] %v527
    %599 = vst [vmem:[#allocation7 + $0x1a0] sm:$0xff] %v370
    %600 = vst [vmem:[#allocation7 + $0x1a8] sm:$0xff] %v372
    %601 = vst [vmem:[#allocation7 + $0x1b0] sm:$0xff] %v531
    %602 = vst [vmem:[#allocation7 + $0x1b8] sm:$0xff] %v533
    %603 = vst [vmem:[#allocation7 + $0x1c0] sm:$0xff] %v376
    %604 = vst [vmem:[#allocation7 + $0x1c8] sm:$0xff] %v378
    %605 = vst [vmem:[#allocation7 + $0x1d0] sm:$0xff] %v537
    %606 = vst [vmem:[#allocation7 + $0x1d8] sm:$0xff] %v539
    %607 = vst [vmem:[#allocation7 + $0x1e0] sm:$0xff] %v382
    %608 = vst [vmem:[#allocation7 + $0x1e8] sm:$0xff] %v384
    %609 = vst [vmem:[#allocation7 + $0x1f0] sm:$0xff] %v543
    %610 = vst [vmem:[#allocation7 + $0x1f8] sm:$0xff] %v545
    // Predicated region
    $region22: #{encoder_forward.1} parent=1 // pred_check
      _
    $region23: #{encoder_forward.1} parent=1 // pred_check_branch
      %612 = sbr.rel (0) target = $region25
    $region24: #{encoder_forward.1} parent=1 // pred_region
      %s614 = ssub.s32 8192, 8192
      %615 = vsyncadd [#allocation4], %s614
      %s616 = sshll.u32 [#allocation7], 4
      %s617 = int_to_ptr.vmem [resolvable:$true] %s616
      %622 = dma.vmem_to_hbm [thread:$0]  %s617, 8192, %s3, [#allocation4], 512, 512, 32
    $region25: #{encoder_forward.1} parent=1 // pred_fallthru
      _
    // Predicated region
    $region26: #{encoder_forward.1} parent=1 // pred_check
      _
    $region27: #{encoder_forward.1} parent=1 // pred_check_branch
      %624 = sbr.rel (0) target = $region29
    $region28: #{encoder_forward.1} parent=1 // pred_region
      %625 = dma.done [#allocation4], 8192
    $region29: #{encoder_forward.1} parent=1 // pred_fallthru
      _
    %626 = vsyncpa [#allocation3], 1
    %627 = vsyncpa [#allocation6], 1
    %628 = vsyncpa [#allocation4], 1

</llo_original>
